<compile_context>
chip_gen: v7x
topology: tpu7x:2x2x1
jax: 0.10.0
libtpu: 0.0.40
codegen_flags: <defaults>
</compile_context>

<pallas_src>
import functools

import jax
import jax.numpy as jnp
from jax.experimental import pallas as pl
from jax.experimental.pallas import tpu as pltpu


def _round_up(x, m):
    return (x + m - 1) // m * m


# ---------------------------------------------------------------------------
# Fused path: on-chip gather (one-hot matmul) + BPR score, batch in lanes.
# ---------------------------------------------------------------------------

def _bpr_fused_kernel(idx_ref, user_t_ref, item_t_ref, out_ref, *, num_neg):
    # idx_ref   : (J+2, TB) int32   row 0 = u, row 1 = i, rows 2.. = js
    # user_t_ref: (D_pad, NU_pad) f32  transposed, zero-padded user table
    # item_t_ref: (D_pad, NI_pad) f32  transposed, zero-padded item table
    # out_ref   : (1, 1, TB) f32
    tb = idx_ref.shape[1]
    nu = user_t_ref.shape[1]
    ni = item_t_ref.shape[1]

    u_row = idx_ref[0:1, :]                                   # (1, TB)
    i_row = idx_ref[1:2, :]                                   # (1, TB)

    # One-hot selection matrices, batch along lanes.
    iota_u = jax.lax.broadcasted_iota(jnp.int32, (nu, tb), 0)
    onehot_u = jnp.where(iota_u == u_row, 1.0, 0.0)           # (NU_pad, TB)

    iota_i = jax.lax.broadcasted_iota(jnp.int32, (ni, tb), 0)
    # Mean over negatives folded into the gather weights:
    #   W = onehot(i) - (1/J) * sum_j onehot(js_j)  ->  one MXU pass total.
    w = jnp.where(iota_i == i_row, 1.0, 0.0)
    neg_w = -1.0 / float(num_neg)
    for j in range(num_neg):                                  # J static, unrolled
        j_row = idx_ref[2 + j:3 + j, :]
        w = w + jnp.where(iota_i == j_row, neg_w, 0.0)        # (NI_pad, TB)

    # Gather == one-hot matmul.  hi/lo split keeps the result f32-accurate
    # even if the compiler emulates the f32 matmul with bf16 MXU passes
    # (one-hot weights are exact in bf16; f32 accumulation recombines hi+lo).
    def exact_gather(table, sel):
        hi = table.astype(jnp.bfloat16).astype(jnp.float32)
        lo = table - hi
        return (jnp.dot(hi, sel, preferred_element_type=jnp.float32)
                + jnp.dot(lo, sel, preferred_element_type=jnp.float32))

    eu_t = exact_gather(user_t_ref[...], onehot_u)            # (D_pad, TB)
    comb_t = exact_gather(item_t_ref[...], w)                 # (D_pad, TB)

    # D-reduction along sublanes -> already lane-dense (1, TB); no masked
    # partial stores, no output relayout.
    x_uij = jnp.sum(eu_t * comb_t, axis=0, keepdims=True)
    out_ref[0] = jax.nn.sigmoid(x_uij)


def _bpr_forward_fused(emb_user_table, emb_item_table, u, i, js2, *, block_b):
    B, J = js2.shape
    NU, D = emb_user_table.shape
    NI = emb_item_table.shape[0]

    # Batch lives in lanes: tile is a multiple of 128 lanes.  Guarantee >= 2
    # grid steps when the batch allows it so v7x can feed both TensorCores.
    B128 = _round_up(max(B, 1), 128)
    num_tiles = max(1, pl.cdiv(B128, max(block_b, 128)))
    if B128 >= 256:
        num_tiles = max(num_tiles, 2)
    TB = _round_up(pl.cdiv(B128, num_tiles), 128)
    B_pad = _round_up(B, TB)
    num_tiles = B_pad // TB
    pad = B_pad - B

    # Lane-dense index packing: row 0 = u, row 1 = i, rows 2.. = js columns.
    # Padded columns use index 0 (valid); their outputs are sliced off below.
    u_p = jnp.pad(u.astype(jnp.int32), (0, pad))
    i_p = jnp.pad(i.astype(jnp.int32), (0, pad))
    js_p = jnp.pad(js2.astype(jnp.int32), ((0, pad), (0, 0)))
    idx_all = jnp.concatenate([u_p[None, :], i_p[None, :], js_p.T], axis=0)

    # Transposed, zero-padded tables stay resident in VMEM across the grid
    # (constant index_map -> no per-step re-fetch of any significance).
    D_pad = _round_up(D, 8)
    NU_pad = _round_up(NU, 8)
    NI_pad = _round_up(NI, 8)
    user_t = jnp.zeros((D_pad, NU_pad), jnp.float32).at[:D, :NU].set(
        emb_user_table.T.astype(jnp.float32))
    item_t = jnp.zeros((D_pad, NI_pad), jnp.float32).at[:D, :NI].set(
        emb_item_table.T.astype(jnp.float32))

    cost = pl.CostEstimate(
        flops=int(4 * B_pad * D_pad * (NU_pad + NI_pad)
                  + B_pad * (J + 2) * NI_pad + 2 * B_pad * D_pad),
        transcendentals=int(B_pad),
        bytes_accessed=int(idx_all.size * 4 + user_t.size * 4
                           + item_t.size * 4 + B_pad * 4),
    )

    out = pl.pallas_call(
        functools.partial(_bpr_fused_kernel, num_neg=J),
        out_shape=jax.ShapeDtypeStruct((num_tiles, 1, TB), jnp.float32),
        grid=(num_tiles,),
        in_specs=[
            pl.BlockSpec((J + 2, TB), lambda b: (0, b)),       # indices (lane-dense)
            pl.BlockSpec((D_pad, NU_pad), lambda b: (0, 0)),   # user table (resident)
            pl.BlockSpec((D_pad, NI_pad), lambda b: (0, 0)),   # item table (resident)
        ],
        out_specs=pl.BlockSpec((1, 1, TB), lambda b: (b, 0, 0)),  # lane-dense output
        compiler_params=pltpu.CompilerParams(
            dimension_semantics=("parallel",)),
        cost_estimate=cost,
    )(idx_all, user_t, item_t)
    return out.reshape(-1)[:B]


# ---------------------------------------------------------------------------
# Fallback path (large tables): gather in the wrapper, merged item stream.
# ---------------------------------------------------------------------------

def _bpr_gathered_kernel(u_ref, items_ref, out_ref, *, num_neg, emb_dim):
    # u_ref    : (TB, D)         user embeddings
    # items_ref: (TB, (J+1)*D)   [positive | negatives ...], lane-dense concat
    # out_ref  : (TB, 1)
    eu = u_ref[...].astype(jnp.float32)
    it = items_ref[...].astype(jnp.float32)
    ei = it[:, 0:emb_dim]
    ej_sum = it[:, emb_dim:2 * emb_dim]
    for j in range(1, num_neg):
        ej_sum = ej_sum + it[:, (1 + j) * emb_dim:(2 + j) * emb_dim]
    comb = ei - ej_sum * (1.0 / float(num_neg))
    x_uij = jnp.sum(eu * comb, axis=-1, keepdims=True)        # (TB, 1)
    # Output is <2% of this path's HBM traffic, so the (TB, 1) block is kept
    # (the lane-dense-output lever only matters once the gather is fused).
    out_ref[...] = jax.nn.sigmoid(x_uij)


def _bpr_forward_gathered(emb_user_table, emb_item_table, u, i, js2, *,
                          transport_dtype, block_b):
    B, J = js2.shape
    D = emb_user_table.shape[1]
    itemsize = jnp.dtype(transport_dtype).itemsize

    # Cap TB so the double-buffered, lane-padded working set stays inside the
    # default scoped-VMEM limit on every generation (v5e: 16 MiB).  TB is a
    # multiple of 16 (bf16 sublane packing).
    lane_pad = lambda n: _round_up(n, 128)
    bytes_per_row = ((lane_pad(D) + lane_pad((J + 1) * D)) * itemsize
                     + lane_pad(1) * 4)
    tb_cap = max(16, (12 * 1024 * 1024 // (2 * bytes_per_row)) // 16 * 16)
    TB = max(16, min(_round_up(block_b, 16), tb_cap, _round_up(B, 16)))
    B_pad = _round_up(B, TB)
    pad = B_pad - B

    u_p = jnp.pad(u, (0, pad))
    i_p = jnp.pad(i, (0, pad))
    js_p = jnp.pad(js2, ((0, pad), (0, 0)))

    # Glue: data-dependent gathers in plain JAX for large tables.  Positive
    # item is merged into the negatives stream -> one lane-dense array, no
    # 32-lane emb_i tile, one fewer DMA per grid step.
    emb_u = jnp.take(emb_user_table, u_p, axis=0).astype(transport_dtype)
    item_idx = jnp.concatenate([i_p[:, None], js_p], axis=1).reshape(-1)
    emb_items = jnp.take(emb_item_table, item_idx, axis=0)
    emb_items = emb_items.astype(transport_dtype).reshape(B_pad, (J + 1) * D)

    cost = pl.CostEstimate(
        flops=int(2 * B_pad * (J + 2) * D),
        transcendentals=int(B_pad),
        bytes_accessed=int(B_pad * (J + 2) * D * itemsize + B_pad * 4),
    )

    out = pl.pallas_call(
        functools.partial(_bpr_gathered_kernel, num_neg=J, emb_dim=D),
        out_shape=jax.ShapeDtypeStruct((B_pad, 1), jnp.float32),
        grid=(B_pad // TB,),
        in_specs=[
            pl.BlockSpec((TB, D), lambda b: (b, 0)),
            pl.BlockSpec((TB, (J + 1) * D), lambda b: (b, 0)),
        ],
        out_specs=pl.BlockSpec((TB, 1), lambda b: (b, 0)),
        compiler_params=pltpu.CompilerParams(
            dimension_semantics=("parallel",)),
        cost_estimate=cost,
    )(emb_u, emb_items)
    return out[:B, 0]


# ---------------------------------------------------------------------------
# Public wrapper == BPR.forward(u, i, js)
# ---------------------------------------------------------------------------

def bpr_forward(emb_user_table, emb_item_table, u, i, js, *,
                fuse_gather=None, transport_dtype=jnp.float32, block_b=4096):
    """Pallas-backed BPR.forward(u, i, js).  Returns (B,) f32 probabilities.

    fuse_gather: None = auto (fuse when the tables are small enough to keep
      resident in VMEM), or force True/False.  transport_dtype only affects
      the non-fused path (bf16 is opt-in; f32 default keeps exact parity).
    """
    js2 = js if js.ndim > 1 else js[:, None]
    NU = emb_user_table.shape[0]
    NI = emb_item_table.shape[0]
    if fuse_gather is None:
        fuse_gather = max(NU, NI) <= 128   # one-hot cost/VMEM scale with vocab
    if fuse_gather:
        return _bpr_forward_fused(emb_user_table, emb_item_table, u, i, js2,
                                  block_b=block_b)
    return _bpr_forward_gathered(emb_user_table, emb_item_table, u, i, js2,
                                 transport_dtype=transport_dtype,
                                 block_b=block_b)


def bpr_reference(emb_user_table, emb_item_table, u, i, js):
    """Pure-JAX reference mirroring the PyTorch forward exactly."""
    emb_u = emb_user_table[u]
    emb_i = emb_item_table[i]
    x_ui = jnp.sum(emb_u * emb_i, axis=1)
    if js.ndim > 1:
        x_uj = 0.0
        for j in range(js.shape[-1]):
            emb_j = emb_item_table[js[:, j]]
            x_uj = x_uj + jnp.sum(emb_u * emb_j, axis=1)
        x_uj = x_uj / js.shape[-1]
    else:
        emb_j = emb_item_table[js]
        x_uj = jnp.sum(emb_u * emb_j, axis=1)
    return jax.nn.sigmoid(x_ui - x_uj)


if __name__ == "__main__":
    # config = {'emb_dim': 32, 'user_cnts': 10, 'item_cnts': 20}
    emb_dim, nb_users, nb_items = 32, 10, 20
    batch, num_neg = 8, 4

    key = jax.random.PRNGKey(0)
    k_user, k_item, k_u, k_i, k_js = jax.random.split(key, 5)

    # nn.Embedding default init: N(0, 1)
    emb_user_table = jax.random.normal(k_user, (nb_users, emb_dim), jnp.float32)
    emb_item_table = jax.random.normal(k_item, (nb_items, emb_dim), jnp.float32)

    u = jax.random.randint(k_u, (batch,), 0, nb_users, jnp.int32)
    i = jax.random.randint(k_i, (batch,), 0, nb_items, jnp.int32)
    js = jax.random.randint(k_js, (batch, num_neg), 0, nb_items, jnp.int32)

    ref2 = bpr_reference(emb_user_table, emb_item_table, u, i, js)
    ref1 = bpr_reference(emb_user_table, emb_item_table, u, i, js[:, 0])

    # 1) Fused on-chip-gather path (default for these tiny tables), 2-D js.
    #    hi/lo table split keeps this ~f32-exact; tolerance left with margin.
    out_fused = bpr_forward(emb_user_table, emb_item_table, u, i, js)
    jax.block_until_ready(out_fused)
    assert out_fused.shape == (batch,)
    assert jnp.allclose(out_fused, ref2, atol=1e-3, rtol=1e-3)

    # 2) Fused path, 1-D js (single negative per example).
    out1 = bpr_forward(emb_user_table, emb_item_table, u, i, js[:, 0])
    jax.block_until_ready(out1)
    assert jnp.allclose(out1, ref1, atol=1e-3, rtol=1e-3)

    # 3) Forced large-table fallback (gather in wrapper), f32 transport: exact.
    out_fb = bpr_forward(emb_user_table, emb_item_table, u, i, js,
                         fuse_gather=False)
    jax.block_until_ready(out_fb)
    assert jnp.allclose(out_fb, ref2, atol=1e-5, rtol=1e-5)

    # 4) Fallback with opt-in bf16 transport (halved HBM traffic, looser tol
    #    only because embeddings are rounded to bf16 for transport).
    out_bf16 = bpr_forward(emb_user_table, emb_item_table, u, i, js,
                           fuse_gather=False, transport_dtype=jnp.bfloat16)
    jax.block_until_ready(out_bf16)
    assert jnp.allclose(out_bf16, ref2, atol=5e-2, rtol=5e-2)

    print("KERNEL_OK")
</pallas_src>

<mosaic_0001>
module attributes {stable_mosaic.version = 11 : i64} {
  func.func @_bpr_fused_kernel(%arg0: i32, %arg1: memref<6x128xi32, #tpu.memory_space<vmem>>, %arg2: memref<32x16xf32, #tpu.memory_space<vmem>>, %arg3: memref<32x24xf32, #tpu.memory_space<vmem>>, %arg4: memref<1x1x128xf32, #tpu.memory_space<vmem>>) attributes {dimension_semantics = [#tpu.dimension_semantics<parallel>], iteration_bounds = array<i64: 1>, scalar_prefetch = 0 : i64, scratch_operands = 0 : i64, tpu.core_type = #tpu.core_type<tc>, window_params = [{transform_indices = @transform_0, window_bounds = array<i64: 6, 128>}, {pipeline_mode = #tpu.pipeline_mode<synchronous>, transform_indices = @transform_1, window_bounds = array<i64: 32, 16>}, {pipeline_mode = #tpu.pipeline_mode<synchronous>, transform_indices = @transform_2, window_bounds = array<i64: 32, 24>}, {transform_indices = @transform_3, window_bounds = array<i64: 1, 1, 128>}]} {
    %c0 = arith.constant 0 : index
    %c0_0 = arith.constant 0 : index
    %0 = vector.load %arg1[%c0, %c0_0] : memref<6x128xi32, #tpu.memory_space<vmem>>, vector<1x128xi32>
    %c1 = arith.constant 1 : index
    %c0_1 = arith.constant 0 : index
    %1 = vector.load %arg1[%c1, %c0_1] : memref<6x128xi32, #tpu.memory_space<vmem>>, vector<1x128xi32>
    %2 = tpu.iota {dimensions = array<i32: 0>} : vector<16x128xi32>
    %3 = vector.broadcast %0 : vector<1x128xi32> to vector<16x128xi32>
    %4 = arith.cmpi eq, %2, %3 : vector<16x128xi32>
    %cst = arith.constant 1.000000e+00 : f32
    %cst_2 = arith.constant 0.000000e+00 : f32
    %5 = vector.broadcast %cst : f32 to vector<16x128xf32>
    %6 = vector.broadcast %cst_2 : f32 to vector<16x128xf32>
    %7 = arith.select %4, %5, %6 : vector<16x128xi1>, vector<16x128xf32>
    %8 = tpu.iota {dimensions = array<i32: 0>} : vector<24x128xi32>
    %9 = vector.broadcast %1 : vector<1x128xi32> to vector<24x128xi32>
    %10 = arith.cmpi eq, %8, %9 : vector<24x128xi32>
    %cst_3 = arith.constant 1.000000e+00 : f32
    %cst_4 = arith.constant 0.000000e+00 : f32
    %11 = vector.broadcast %cst_3 : f32 to vector<24x128xf32>
    %12 = vector.broadcast %cst_4 : f32 to vector<24x128xf32>
    %13 = arith.select %10, %11, %12 : vector<24x128xi1>, vector<24x128xf32>
    %c2 = arith.constant 2 : index
    %c0_5 = arith.constant 0 : index
    %14 = vector.load %arg1[%c2, %c0_5] : memref<6x128xi32, #tpu.memory_space<vmem>>, vector<1x128xi32>
    %15 = vector.broadcast %14 : vector<1x128xi32> to vector<24x128xi32>
    %16 = arith.cmpi eq, %8, %15 : vector<24x128xi32>
    %cst_6 = arith.constant -2.500000e-01 : f32
    %cst_7 = arith.constant 0.000000e+00 : f32
    %17 = vector.broadcast %cst_6 : f32 to vector<24x128xf32>
    %18 = vector.broadcast %cst_7 : f32 to vector<24x128xf32>
    %19 = arith.select %16, %17, %18 : vector<24x128xi1>, vector<24x128xf32>
    %20 = arith.addf %13, %19 : vector<24x128xf32>
    %c3 = arith.constant 3 : index
    %c0_8 = arith.constant 0 : index
    %21 = vector.load %arg1[%c3, %c0_8] : memref<6x128xi32, #tpu.memory_space<vmem>>, vector<1x128xi32>
    %22 = vector.broadcast %21 : vector<1x128xi32> to vector<24x128xi32>
    %23 = arith.cmpi eq, %8, %22 : vector<24x128xi32>
    %cst_9 = arith.constant -2.500000e-01 : f32
    %cst_10 = arith.constant 0.000000e+00 : f32
    %24 = vector.broadcast %cst_9 : f32 to vector<24x128xf32>
    %25 = vector.broadcast %cst_10 : f32 to vector<24x128xf32>
    %26 = arith.select %23, %24, %25 : vector<24x128xi1>, vector<24x128xf32>
    %27 = arith.addf %20, %26 : vector<24x128xf32>
    %c4 = arith.constant 4 : index
    %c0_11 = arith.constant 0 : index
    %28 = vector.load %arg1[%c4, %c0_11] : memref<6x128xi32, #tpu.memory_space<vmem>>, vector<1x128xi32>
    %29 = vector.broadcast %28 : vector<1x128xi32> to vector<24x128xi32>
    %30 = arith.cmpi eq, %8, %29 : vector<24x128xi32>
    %cst_12 = arith.constant -2.500000e-01 : f32
    %cst_13 = arith.constant 0.000000e+00 : f32
    %31 = vector.broadcast %cst_12 : f32 to vector<24x128xf32>
    %32 = vector.broadcast %cst_13 : f32 to vector<24x128xf32>
    %33 = arith.select %30, %31, %32 : vector<24x128xi1>, vector<24x128xf32>
    %34 = arith.addf %27, %33 : vector<24x128xf32>
    %c5 = arith.constant 5 : index
    %c0_14 = arith.constant 0 : index
    %35 = vector.load %arg1[%c5, %c0_14] : memref<6x128xi32, #tpu.memory_space<vmem>>, vector<1x128xi32>
    %36 = vector.broadcast %35 : vector<1x128xi32> to vector<24x128xi32>
    %37 = arith.cmpi eq, %8, %36 : vector<24x128xi32>
    %cst_15 = arith.constant -2.500000e-01 : f32
    %cst_16 = arith.constant 0.000000e+00 : f32
    %38 = vector.broadcast %cst_15 : f32 to vector<24x128xf32>
    %39 = vector.broadcast %cst_16 : f32 to vector<24x128xf32>
    %40 = arith.select %37, %38, %39 : vector<24x128xi1>, vector<24x128xf32>
    %41 = arith.addf %34, %40 : vector<24x128xf32>
    %c0_17 = arith.constant 0 : index
    %c0_18 = arith.constant 0 : index
    %42 = vector.load %arg2[%c0_17, %c0_18] : memref<32x16xf32, #tpu.memory_space<vmem>>, vector<32x16xf32>
    %43 = arith.truncf %42 : vector<32x16xf32> to vector<32x16xbf16>
    %44 = arith.extf %43 : vector<32x16xbf16> to vector<32x16xf32>
    %45 = arith.subf %42, %44 : vector<32x16xf32>
    %cst_19 = arith.constant dense<0.000000e+00> : vector<32x128xf32>
    %46 = tpu.matmul %44, %7, %cst_19 {dimension_numbers = #tpu.dot_dimension_numbers<[1], [0], [0], [1], [0, 0, 1, 1], [], []>} : vector<32x16xf32>, vector<16x128xf32>, vector<32x128xf32> -> vector<32x128xf32>
    %cst_20 = arith.constant dense<0.000000e+00> : vector<32x128xf32>
    %47 = tpu.matmul %45, %7, %cst_20 {dimension_numbers = #tpu.dot_dimension_numbers<[1], [0], [0], [1], [0, 0, 1, 1], [], []>} : vector<32x16xf32>, vector<16x128xf32>, vector<32x128xf32> -> vector<32x128xf32>
    %48 = arith.addf %46, %47 : vector<32x128xf32>
    %c0_21 = arith.constant 0 : index
    %c0_22 = arith.constant 0 : index
    %49 = vector.load %arg3[%c0_21, %c0_22] : memref<32x24xf32, #tpu.memory_space<vmem>>, vector<32x24xf32>
    %50 = arith.truncf %49 : vector<32x24xf32> to vector<32x24xbf16>
    %51 = arith.extf %50 : vector<32x24xbf16> to vector<32x24xf32>
    %52 = arith.subf %49, %51 : vector<32x24xf32>
    %cst_23 = arith.constant dense<0.000000e+00> : vector<32x128xf32>
    %53 = tpu.matmul %51, %41, %cst_23 {dimension_numbers = #tpu.dot_dimension_numbers<[1], [0], [0], [1], [0, 0, 1, 1], [], []>} : vector<32x24xf32>, vector<24x128xf32>, vector<32x128xf32> -> vector<32x128xf32>
    %cst_24 = arith.constant dense<0.000000e+00> : vector<32x128xf32>
    %54 = tpu.matmul %52, %41, %cst_24 {dimension_numbers = #tpu.dot_dimension_numbers<[1], [0], [0], [1], [0, 0, 1, 1], [], []>} : vector<32x24xf32>, vector<24x128xf32>, vector<32x128xf32> -> vector<32x128xf32>
    %55 = arith.addf %53, %54 : vector<32x128xf32>
    %56 = arith.mulf %48, %55 : vector<32x128xf32>
    %cst_25 = arith.constant dense<0.000000e+00> : vector<128xf32>
    %57 = vector.multi_reduction <add>, %56, %cst_25 [0] : vector<32x128xf32> to vector<128xf32>
    %58 = vector.shape_cast %57 : vector<128xf32> to vector<1x128xf32>
    %59 = arith.negf %58 : vector<1x128xf32>
    %60 = math.exp %59 : vector<1x128xf32>
    %cst_26 = arith.constant 1.000000e+00 : f32
    %61 = vector.broadcast %cst_26 : f32 to vector<1x128xf32>
    %62 = arith.addf %61, %60 : vector<1x128xf32>
    %63 = arith.divf %61, %62 : vector<1x128xf32>
    %c0_27 = arith.constant 0 : index
    %c0_28 = arith.constant 0 : index
    %c0_29 = arith.constant 0 : index
    %64 = vector.load %arg4[%c0_27, %c0_28, %c0_29] : memref<1x1x128xf32, #tpu.memory_space<vmem>>, vector<1x1x128xf32>
    %65 = vector.shape_cast %64 : vector<1x1x128xf32> to vector<1x128xf32>
    %66 = vector.shape_cast %63 : vector<1x128xf32> to vector<1x1x128xf32>
    tpu.vector_store %arg4[%c0_27, %c0_28, %c0_29], %66 {strides = array<i32>} : memref<1x1x128xf32, #tpu.memory_space<vmem>>, vector<1x1x128xf32>,
    return
  }
  func.func @transform_0(%arg0: i32) -> (i32, i32) {
    %c0_i32 = arith.constant 0 : i32
    %c0_i32_0 = arith.constant 0 : i32
    return %c0_i32, %arg0 : i32, i32
  }
  func.func @transform_1(%arg0: i32) -> (i32, i32) {
    %c0_i32 = arith.constant 0 : i32
    %c0_i32_0 = arith.constant 0 : i32
    %c0_i32_1 = arith.constant 0 : i32
    return %c0_i32, %c0_i32_0 : i32, i32
  }
  func.func @transform_2(%arg0: i32) -> (i32, i32) {
    %c0_i32 = arith.constant 0 : i32
    %c0_i32_0 = arith.constant 0 : i32
    %c0_i32_1 = arith.constant 0 : i32
    return %c0_i32, %c0_i32_0 : i32, i32
  }
  func.func @transform_3(%arg0: i32) -> (i32, i32, i32) {
    %c0_i32 = arith.constant 0 : i32
    %c0_i32_0 = arith.constant 0 : i32
    %c0_i32_1 = arith.constant 0 : i32
    return %arg0, %c0_i32, %c0_i32_0 : i32, i32, i32
  }
}

</mosaic_0001>

<llo_original>
// kernel: tpu_custom_call.1
$region0: #{tpu_custom_call.1}
  #allocation0 [shape = 'u32[]', space=smem, size = 0x4, offset = 0x4, fixed_abs, tag = 'smem constant byte address 0x4 - core index']
  #allocation1 [shape = 'u32[144,128]{1,0:T(1,128)}', space=vmem, size = 0x12000, scoped, tag = 'internal scratch']
  %s0 = inlined_call_operand.vmem [shape: s32[6,128], index: 0, kind: input, shape index: {}]
  %s1 = inlined_call_operand.vmem [shape: f32[32,16], index: 1, kind: input, shape index: {}]
  %s2 = inlined_call_operand.vmem [shape: f32[32,24], index: 2, kind: input, shape index: {}]
  %s3 = inlined_call_operand.hbm [shape: f32[1,1,128], index: 3, kind: output, shape index: {}]
  %s4 = sld [smem:[#allocation0]]
  $region22: #{tpu_custom_call.1} parent=0
    _
  %s6 = ssub.s32 1, %s4
  %s7 = scalar_select 0, %s6, %s4
  $region1: #{tpu_custom_call.1} parent=0
    #allocation2 [shape = 'u8[512]{0}', space=vmem, size = 0x400, scoped, tag = 'output window, operand 0, single buffered']
    #allocation3 [shape = 's32[1]{0}', space=sflag, size = 0x4, scoped, tag = 'scoped memory for tpu_custom_call.1']
    %8 = vsyncpa [#allocation3], 0
    // Predicated region
    $region2: #{tpu_custom_call.1} parent=1 // pred_check
      _
    $region3: #{tpu_custom_call.1} parent=1 // pred_check_branch
      %10 = sbr.rel (0) target = $region5
    $region4: #{tpu_custom_call.1} parent=1 // pred_region
      _
    $region5: #{tpu_custom_call.1} parent=1 // pred_fallthru
      _
    // Predicated region
    $region6: #{tpu_custom_call.1} parent=1 // pred_check
      _
    $region7: #{tpu_custom_call.1} parent=1 // pred_check_branch
      %12 = sbr.rel (0) target = $region9
    $region8: #{tpu_custom_call.1} parent=1 // pred_region
      _
    $region9: #{tpu_custom_call.1} parent=1 // pred_fallthru
      _
    // Predicated region
    $region10: #{tpu_custom_call.1} parent=1 // pred_check
      _
    $region11: #{tpu_custom_call.1} parent=1 // pred_check_branch
      %14 = sbr.rel (0) target = $region13
    $region12: #{tpu_custom_call.1} parent=1 // pred_region
      _
    $region13: #{tpu_custom_call.1} parent=1 // pred_fallthru
      _
    %v15 = vld [vmem:[%s0] sm:$0x1]
    %v16 = vld [vmem:[%s0 + $0x1] sm:$0x1]
    %v17 = vlaneseq
    %v18 = vshrl.u32 %v17, 7
    %v19 = vadd.s32 %v18, 8
    %v20 = vlaneseq
    %v21 = vshrl.u32 %v20, 7
    %v22 = vsub.s32 0, %v21
    %v23 = vrot.slane %v15, %v22
    %vm24 = vcmp.eq.s32.totalorder %v18, %v23
    %vm25 = vcmp.eq.s32.totalorder %v19, %v23
    %v26 = vsel %vm24, 1.0, 0.0
    %v27 = vsel %vm25, 1.0, 0.0
    %v28 = vadd.s32 %v18, 16
    %v29 = vlaneseq
    %v30 = vshrl.u32 %v29, 7
    %v31 = vsub.s32 0, %v30
    %v32 = vrot.slane %v16, %v31
    %vm33 = vcmp.eq.s32.totalorder %v18, %v32
    %vm34 = vcmp.eq.s32.totalorder %v19, %v32
    %vm35 = vcmp.eq.s32.totalorder %v28, %v32
    %v36 = vsel %vm33, 1.0, 0.0
    %v37 = vsel %vm34, 1.0, 0.0
    %v38 = vsel %vm35, 1.0, 0.0
    %v39 = vld [vmem:[%s0 + $0x2] sm:$0x1]
    %v40 = vlaneseq
    %v41 = vshrl.u32 %v40, 7
    %v42 = vsub.s32 0, %v41
    %v43 = vrot.slane %v39, %v42
    %vm44 = vcmp.eq.s32.totalorder %v18, %v43
    %vm45 = vcmp.eq.s32.totalorder %v19, %v43
    %vm46 = vcmp.eq.s32.totalorder %v28, %v43
    %v47 = vsel %vm44, -0.25, 0.0
    %v48 = vsel %vm45, -0.25, 0.0
    %v49 = vsel %vm46, -0.25, 0.0
    %v50 = vadd.f32 %v36, %v47
    %v51 = vadd.f32 %v37, %v48
    %v52 = vadd.f32 %v38, %v49
    %v53 = vld [vmem:[%s0 + $0x3] sm:$0x1]
    %v54 = vlaneseq
    %v55 = vshrl.u32 %v54, 7
    %v56 = vsub.s32 0, %v55
    %v57 = vrot.slane %v53, %v56
    %vm58 = vcmp.eq.s32.totalorder %v18, %v57
    %vm59 = vcmp.eq.s32.totalorder %v19, %v57
    %vm60 = vcmp.eq.s32.totalorder %v28, %v57
    %v61 = vsel %vm58, -0.25, 0.0
    %v62 = vsel %vm59, -0.25, 0.0
    %v63 = vsel %vm60, -0.25, 0.0
    %v64 = vadd.f32 %v50, %v61
    %v65 = vadd.f32 %v51, %v62
    %v66 = vadd.f32 %v52, %v63
    %v67 = vld [vmem:[%s0 + $0x4] sm:$0x1]
    %v68 = vlaneseq
    %v69 = vshrl.u32 %v68, 7
    %v70 = vsub.s32 0, %v69
    %v71 = vrot.slane %v67, %v70
    %vm72 = vcmp.eq.s32.totalorder %v18, %v71
    %vm73 = vcmp.eq.s32.totalorder %v19, %v71
    %vm74 = vcmp.eq.s32.totalorder %v28, %v71
    %v75 = vsel %vm72, -0.25, 0.0
    %v76 = vsel %vm73, -0.25, 0.0
    %v77 = vsel %vm74, -0.25, 0.0
    %v78 = vadd.f32 %v64, %v75
    %v79 = vadd.f32 %v65, %v76
    %v80 = vadd.f32 %v66, %v77
    %v81 = vld [vmem:[%s0 + $0x5] sm:$0x1]
    %v82 = vlaneseq
    %v83 = vshrl.u32 %v82, 7
    %v84 = vsub.s32 0, %v83
    %v85 = vrot.slane %v81, %v84
    %vm86 = vcmp.eq.s32.totalorder %v18, %v85
    %vm87 = vcmp.eq.s32.totalorder %v19, %v85
    %vm88 = vcmp.eq.s32.totalorder %v28, %v85
    %v89 = vsel %vm86, -0.25, 0.0
    %v90 = vsel %vm87, -0.25, 0.0
    %v91 = vsel %vm88, -0.25, 0.0
    %v92 = vadd.f32 %v78, %v89
    %v93 = vadd.f32 %v79, %v90
    %v94 = vadd.f32 %v80, %v91
    %v95 = vld [vmem:[%s1] sm:$0xff]
    %v96 = vld [vmem:[%s1 + $0x8] sm:$0xff]
    %v97 = vld [vmem:[%s1 + $0x10] sm:$0xff]
    %v98 = vld [vmem:[%s1 + $0x18] sm:$0xff]
    %v99 = vpack.c.bf16 %v96, %v95
    %v100 = vpack.c.bf16 %v98, %v97
    %v101 = vunpack.c.l.bf16 %v99
    %v102 = vunpack.c.h.bf16 %v99
    %v103 = vunpack.c.l.bf16 %v100
    %v104 = vunpack.c.h.bf16 %v100
    %v105 = vsub.f32 %v95, %v101
    %v106 = vsub.f32 %v96, %v102
    %v107 = vsub.f32 %v97, %v103
    %v108 = vsub.f32 %v98, %v104
    %vm109 = vcmask 130048
    %v111 = vsel %vm109, %v105, 0
    %v114 = vsel %vm109, %v106, 0
    %v117 = vsel %vm109, %v107, 0
    %v120 = vsel %vm109, %v108, 0
    %122 = vmatprep.subr.mxu0 0.0
    %123 = vmatpush1.msra.mxu0 %v26
    %124 = vmatprep.subr.mxu0 0.0
    %125 = vmatpush1.msra.mxu0 %v27
    %126 = vmatprep.subr.mxu0 0.0
    %127 = vmatpush1.msra.mxu0 0.0
    %128 = vmatprep.subr.mxu0 0.0
    %129 = vmatpush1.msra.mxu0 0.0
    %130 = vmatprep.subr.mxu0 0.0
    %131 = vmatpush1.msra.mxu0 0.0
    %132 = vmatprep.subr.mxu0 0.0
    %133 = vmatpush1.msra.mxu0 0.0
    %134 = vmatprep.subr.mxu0 0.0
    %135 = vmatpush1.msra.mxu0 0.0
    %136 = vmatprep.subr.mxu0 0.0
    %137 = vmatpush1.msra.mxu0 0.0
    %138 = vmatprep.subr.mxu0 0.0
    %139 = vmatpush1.msra.mxu0 0.0
    %140 = vmatprep.subr.mxu0 0.0
    %141 = vmatpush1.msra.mxu0 0.0
    %142 = vmatprep.subr.mxu0 0.0
    %143 = vmatpush1.msra.mxu0 0.0
    %144 = vmatprep.subr.mxu0 0.0
    %145 = vmatpush1.msra.mxu0 0.0
    %146 = vmatprep.subr.mxu0 0.0
    %147 = vmatpush1.msra.mxu0 0.0
    %148 = vmatprep.subr.mxu0 0.0
    %149 = vmatpush1.msra.mxu0 0.0
    %150 = vmatprep.subr.mxu0 0.0
    %151 = vmatpush1.msra.mxu0 0.0
    %152 = vmatprep.subr.mxu0 0.0
    %153 = vmatpush1.msra.mxu0 0.0
    %154 = vmatprep.subr.mxu0 0.0
    %155 = vmatpush1.msra.mxu0 0.0
    %156 = vmatprep.subr.mxu0 0.0
    %157 = vmatpush1.msra.mxu0 0.0
    %158 = vmatprep.subr.mxu0 0.0
    %159 = vmatpush1.msra.mxu0 0.0
    %160 = vmatprep.subr.mxu0 0.0
    %161 = vmatpush1.msra.mxu0 0.0
    %162 = vmatprep.subr.mxu0 0.0
    %163 = vmatpush1.msra.mxu0 0.0
    %164 = vmatprep.subr.mxu0 0.0
    %165 = vmatpush1.msra.mxu0 0.0
    %166 = vmatprep.subr.mxu0 0.0
    %167 = vmatpush1.msra.mxu0 0.0
    %168 = vmatprep.subr.mxu0 0.0
    %169 = vmatpush1.msra.mxu0 0.0
    %170 = vmatprep.subr.mxu0 0.0
    %171 = vmatpush1.msra.mxu0 0.0
    %172 = vmatprep.subr.mxu0 0.0
    %173 = vmatpush1.msra.mxu0 0.0
    %174 = vmatprep.subr.mxu0 0.0
    %175 = vmatpush1.msra.mxu0 0.0
    %176 = vmatprep.subr.mxu0 0.0
    %177 = vmatpush1.msra.mxu0 0.0
    %178 = vmatprep.subr.mxu0 0.0
    %179 = vmatpush1.msra.mxu0 0.0
    %180 = vmatprep.subr.mxu0 0.0
    %181 = vmatpush1.msra.mxu0 0.0
    %182 = vmatprep.subr.mxu0 0.0
    %183 = vmatpush1.msra.mxu0 0.0
    %184 = vmatprep.subr.mxu0 0.0
    %185 = vmatpush1.msra.mxu0 0.0
    %186 = vmatprep.mubr.f32.mxu0 0.0
    %187 = vmatmul.mubr.f32.gmra.mrb[0].mxu0 %v111
    %v188 = vpop.f32.mrb[0].mxu0
    %v189 = vadd.f32 0.0, %v188
    %v190 = vpop.f32.mrb[0].mxu0
    %191 = vmatprep.mubr.f32.mxu0 0.0
    %192 = vmatmul.mubr.f32.gmra.mrb[0].mxu0 %v114
    %v193 = vpop.f32.mrb[0].mxu0
    %v194 = vadd.f32 0.0, %v193
    %v195 = vpop.f32.mrb[0].mxu0
    %196 = vmatprep.mubr.f32.mxu0 0.0
    %197 = vmatmul.mubr.f32.gmra.mrb[0].mxu0 %v117
    %v198 = vpop.f32.mrb[0].mxu0
    %v199 = vadd.f32 0.0, %v198
    %v200 = vpop.f32.mrb[0].mxu0
    %201 = vmatprep.mubr.f32.mxu0 0.0
    %202 = vmatmul.mubr.f32.gmra.mrb[0].mxu0 %v120
    %v203 = vpop.f32.mrb[0].mxu0
    %v204 = vadd.f32 0.0, %v203
    %v205 = vpop.f32.mrb[0].mxu0
    %206 = vdwg.mxu0
    %v208 = vsel %vm109, %v101, 0
    %v211 = vsel %vm109, %v102, 0
    %v214 = vsel %vm109, %v103, 0
    %v217 = vsel %vm109, %v104, 0
    %219 = vmatprep.subr.mxu0 0.0
    %220 = vmatpush1.msra.mxu0 %v26
    %221 = vmatprep.subr.mxu0 0.0
    %222 = vmatpush1.msra.mxu0 %v27
    %223 = vmatprep.subr.mxu0 0.0
    %224 = vmatpush1.msra.mxu0 0.0
    %225 = vmatprep.subr.mxu0 0.0
    %226 = vmatpush1.msra.mxu0 0.0
    %227 = vmatprep.subr.mxu0 0.0
    %228 = vmatpush1.msra.mxu0 0.0
    %229 = vmatprep.subr.mxu0 0.0
    %230 = vmatpush1.msra.mxu0 0.0
    %231 = vmatprep.subr.mxu0 0.0
    %232 = vmatpush1.msra.mxu0 0.0
    %233 = vmatprep.subr.mxu0 0.0
    %234 = vmatpush1.msra.mxu0 0.0
    %235 = vmatprep.subr.mxu0 0.0
    %236 = vmatpush1.msra.mxu0 0.0
    %237 = vmatprep.subr.mxu0 0.0
    %238 = vmatpush1.msra.mxu0 0.0
    %239 = vmatprep.subr.mxu0 0.0
    %240 = vmatpush1.msra.mxu0 0.0
    %241 = vmatprep.subr.mxu0 0.0
    %242 = vmatpush1.msra.mxu0 0.0
    %243 = vmatprep.subr.mxu0 0.0
    %244 = vmatpush1.msra.mxu0 0.0
    %245 = vmatprep.subr.mxu0 0.0
    %246 = vmatpush1.msra.mxu0 0.0
    %247 = vmatprep.subr.mxu0 0.0
    %248 = vmatpush1.msra.mxu0 0.0
    %249 = vmatprep.subr.mxu0 0.0
    %250 = vmatpush1.msra.mxu0 0.0
    %251 = vmatprep.subr.mxu0 0.0
    %252 = vmatpush1.msra.mxu0 0.0
    %253 = vmatprep.subr.mxu0 0.0
    %254 = vmatpush1.msra.mxu0 0.0
    %255 = vmatprep.subr.mxu0 0.0
    %256 = vmatpush1.msra.mxu0 0.0
    %257 = vmatprep.subr.mxu0 0.0
    %258 = vmatpush1.msra.mxu0 0.0
    %259 = vmatprep.subr.mxu0 0.0
    %260 = vmatpush1.msra.mxu0 0.0
    %261 = vmatprep.subr.mxu0 0.0
    %262 = vmatpush1.msra.mxu0 0.0
    %263 = vmatprep.subr.mxu0 0.0
    %264 = vmatpush1.msra.mxu0 0.0
    %265 = vmatprep.subr.mxu0 0.0
    %266 = vmatpush1.msra.mxu0 0.0
    %267 = vmatprep.subr.mxu0 0.0
    %268 = vmatpush1.msra.mxu0 0.0
    %269 = vmatprep.subr.mxu0 0.0
    %270 = vmatpush1.msra.mxu0 0.0
    %271 = vmatprep.subr.mxu0 0.0
    %272 = vmatpush1.msra.mxu0 0.0
    %273 = vmatprep.subr.mxu0 0.0
    %274 = vmatpush1.msra.mxu0 0.0
    %275 = vmatprep.subr.mxu0 0.0
    %276 = vmatpush1.msra.mxu0 0.0
    %277 = vmatprep.subr.mxu0 0.0
    %278 = vmatpush1.msra.mxu0 0.0
    %279 = vmatprep.subr.mxu0 0.0
    %280 = vmatpush1.msra.mxu0 0.0
    %281 = vmatprep.subr.mxu0 0.0
    %282 = vmatpush1.msra.mxu0 0.0
    %283 = vmatprep.mubr.f32.mxu0 0.0
    %284 = vmatmul.mubr.f32.gmra.mrb[0].mxu0 %v208
    %v285 = vpop.f32.mrb[0].mxu0
    %v286 = vadd.f32 %v189, %v285
    %v287 = vpop.f32.mrb[0].mxu0
    %288 = vmatprep.mubr.f32.mxu0 0.0
    %289 = vmatmul.mubr.f32.gmra.mrb[0].mxu0 %v211
    %v290 = vpop.f32.mrb[0].mxu0
    %v291 = vadd.f32 %v194, %v290
    %v292 = vpop.f32.mrb[0].mxu0
    %293 = vmatprep.mubr.f32.mxu0 0.0
    %294 = vmatmul.mubr.f32.gmra.mrb[0].mxu0 %v214
    %v295 = vpop.f32.mrb[0].mxu0
    %v296 = vadd.f32 %v199, %v295
    %v297 = vpop.f32.mrb[0].mxu0
    %298 = vmatprep.mubr.f32.mxu0 0.0
    %299 = vmatmul.mubr.f32.gmra.mrb[0].mxu0 %v217
    %v300 = vpop.f32.mrb[0].mxu0
    %v301 = vadd.f32 %v204, %v300
    %v302 = vpop.f32.mrb[0].mxu0
    %303 = vdwg.mxu0
    %v304 = vld [vmem:[%s2] sm:$0xff]
    %v305 = vld [vmem:[%s2 + $0x8] sm:$0xff]
    %v306 = vld [vmem:[%s2 + $0x10] sm:$0xff]
    %v307 = vld [vmem:[%s2 + $0x18] sm:$0xff]
    %v308 = vpack.c.bf16 %v305, %v304
    %v309 = vpack.c.bf16 %v307, %v306
    %v310 = vunpack.c.l.bf16 %v308
    %v311 = vunpack.c.h.bf16 %v308
    %v312 = vunpack.c.l.bf16 %v309
    %v313 = vunpack.c.h.bf16 %v309
    %v314 = vsub.f32 %v304, %v310
    %v315 = vsub.f32 %v305, %v311
    %v316 = vsub.f32 %v306, %v312
    %v317 = vsub.f32 %v307, %v313
    %vm318 = vcmask 195584
    %v320 = vsel %vm318, %v314, 0
    %v323 = vsel %vm318, %v315, 0
    %v326 = vsel %vm318, %v316, 0
    %v329 = vsel %vm318, %v317, 0
    %331 = vmatprep.subr.mxu0 0.0
    %332 = vmatpush1.msra.mxu0 %v92
    %333 = vmatprep.subr.mxu0 0.0
    %334 = vmatpush1.msra.mxu0 %v93
    %335 = vmatprep.subr.mxu0 0.0
    %336 = vmatpush1.msra.mxu0 %v94
    %337 = vmatprep.subr.mxu0 0.0
    %338 = vmatpush1.msra.mxu0 0.0
    %339 = vmatprep.subr.mxu0 0.0
    %340 = vmatpush1.msra.mxu0 0.0
    %341 = vmatprep.subr.mxu0 0.0
    %342 = vmatpush1.msra.mxu0 0.0
    %343 = vmatprep.subr.mxu0 0.0
    %344 = vmatpush1.msra.mxu0 0.0
    %345 = vmatprep.subr.mxu0 0.0
    %346 = vmatpush1.msra.mxu0 0.0
    %347 = vmatprep.subr.mxu0 0.0
    %348 = vmatpush1.msra.mxu0 0.0
    %349 = vmatprep.subr.mxu0 0.0
    %350 = vmatpush1.msra.mxu0 0.0
    %351 = vmatprep.subr.mxu0 0.0
    %352 = vmatpush1.msra.mxu0 0.0
    %353 = vmatprep.subr.mxu0 0.0
    %354 = vmatpush1.msra.mxu0 0.0
    %355 = vmatprep.subr.mxu0 0.0
    %356 = vmatpush1.msra.mxu0 0.0
    %357 = vmatprep.subr.mxu0 0.0
    %358 = vmatpush1.msra.mxu0 0.0
    %359 = vmatprep.subr.mxu0 0.0
    %360 = vmatpush1.msra.mxu0 0.0
    %361 = vmatprep.subr.mxu0 0.0
    %362 = vmatpush1.msra.mxu0 0.0
    %363 = vmatprep.subr.mxu0 0.0
    %364 = vmatpush1.msra.mxu0 0.0
    %365 = vmatprep.subr.mxu0 0.0
    %366 = vmatpush1.msra.mxu0 0.0
    %367 = vmatprep.subr.mxu0 0.0
    %368 = vmatpush1.msra.mxu0 0.0
    %369 = vmatprep.subr.mxu0 0.0
    %370 = vmatpush1.msra.mxu0 0.0
    %371 = vmatprep.subr.mxu0 0.0
    %372 = vmatpush1.msra.mxu0 0.0
    %373 = vmatprep.subr.mxu0 0.0
    %374 = vmatpush1.msra.mxu0 0.0
    %375 = vmatprep.subr.mxu0 0.0
    %376 = vmatpush1.msra.mxu0 0.0
    %377 = vmatprep.subr.mxu0 0.0
    %378 = vmatpush1.msra.mxu0 0.0
    %379 = vmatprep.subr.mxu0 0.0
    %380 = vmatpush1.msra.mxu0 0.0
    %381 = vmatprep.subr.mxu0 0.0
    %382 = vmatpush1.msra.mxu0 0.0
    %383 = vmatprep.subr.mxu0 0.0
    %384 = vmatpush1.msra.mxu0 0.0
    %385 = vmatprep.subr.mxu0 0.0
    %386 = vmatpush1.msra.mxu0 0.0
    %387 = vmatprep.subr.mxu0 0.0
    %388 = vmatpush1.msra.mxu0 0.0
    %389 = vmatprep.subr.mxu0 0.0
    %390 = vmatpush1.msra.mxu0 0.0
    %391 = vmatprep.subr.mxu0 0.0
    %392 = vmatpush1.msra.mxu0 0.0
    %393 = vmatprep.subr.mxu0 0.0
    %394 = vmatpush1.msra.mxu0 0.0
    %395 = vmatprep.mubr.f32.mxu0 0.0
    %396 = vmatmul.mubr.f32.gmra.mrb[0].mxu0 %v320
    %v397 = vpop.f32.mrb[0].mxu0
    %v398 = vadd.f32 0.0, %v397
    %v399 = vpop.f32.mrb[0].mxu0
    %400 = vmatprep.mubr.f32.mxu0 0.0
    %401 = vmatmul.mubr.f32.gmra.mrb[0].mxu0 %v323
    %v402 = vpop.f32.mrb[0].mxu0
    %v403 = vadd.f32 0.0, %v402
    %v404 = vpop.f32.mrb[0].mxu0
    %405 = vmatprep.mubr.f32.mxu0 0.0
    %406 = vmatmul.mubr.f32.gmra.mrb[0].mxu0 %v326
    %v407 = vpop.f32.mrb[0].mxu0
    %v408 = vadd.f32 0.0, %v407
    %v409 = vpop.f32.mrb[0].mxu0
    %410 = vmatprep.mubr.f32.mxu0 0.0
    %411 = vmatmul.mubr.f32.gmra.mrb[0].mxu0 %v329
    %v412 = vpop.f32.mrb[0].mxu0
    %v413 = vadd.f32 0.0, %v412
    %v414 = vpop.f32.mrb[0].mxu0
    %415 = vdwg.mxu0
    %v417 = vsel %vm318, %v310, 0
    %v420 = vsel %vm318, %v311, 0
    %v423 = vsel %vm318, %v312, 0
    %v426 = vsel %vm318, %v313, 0
    %428 = vmatprep.subr.mxu0 0.0
    %429 = vmatpush1.msra.mxu0 %v92
    %430 = vmatprep.subr.mxu0 0.0
    %431 = vmatpush1.msra.mxu0 %v93
    %432 = vmatprep.subr.mxu0 0.0
    %433 = vmatpush1.msra.mxu0 %v94
    %434 = vmatprep.subr.mxu0 0.0
    %435 = vmatpush1.msra.mxu0 0.0
    %436 = vmatprep.subr.mxu0 0.0
    %437 = vmatpush1.msra.mxu0 0.0
    %438 = vmatprep.subr.mxu0 0.0
    %439 = vmatpush1.msra.mxu0 0.0
    %440 = vmatprep.subr.mxu0 0.0
    %441 = vmatpush1.msra.mxu0 0.0
    %442 = vmatprep.subr.mxu0 0.0
    %443 = vmatpush1.msra.mxu0 0.0
    %444 = vmatprep.subr.mxu0 0.0
    %445 = vmatpush1.msra.mxu0 0.0
    %446 = vmatprep.subr.mxu0 0.0
    %447 = vmatpush1.msra.mxu0 0.0
    %448 = vmatprep.subr.mxu0 0.0
    %449 = vmatpush1.msra.mxu0 0.0
    %450 = vmatprep.subr.mxu0 0.0
    %451 = vmatpush1.msra.mxu0 0.0
    %452 = vmatprep.subr.mxu0 0.0
    %453 = vmatpush1.msra.mxu0 0.0
    %454 = vmatprep.subr.mxu0 0.0
    %455 = vmatpush1.msra.mxu0 0.0
    %456 = vmatprep.subr.mxu0 0.0
    %457 = vmatpush1.msra.mxu0 0.0
    %458 = vmatprep.subr.mxu0 0.0
    %459 = vmatpush1.msra.mxu0 0.0
    %460 = vmatprep.subr.mxu0 0.0
    %461 = vmatpush1.msra.mxu0 0.0
    %462 = vmatprep.subr.mxu0 0.0
    %463 = vmatpush1.msra.mxu0 0.0
    %464 = vmatprep.subr.mxu0 0.0
    %465 = vmatpush1.msra.mxu0 0.0
    %466 = vmatprep.subr.mxu0 0.0
    %467 = vmatpush1.msra.mxu0 0.0
    %468 = vmatprep.subr.mxu0 0.0
    %469 = vmatpush1.msra.mxu0 0.0
    %470 = vmatprep.subr.mxu0 0.0
    %471 = vmatpush1.msra.mxu0 0.0
    %472 = vmatprep.subr.mxu0 0.0
    %473 = vmatpush1.msra.mxu0 0.0
    %474 = vmatprep.subr.mxu0 0.0
    %475 = vmatpush1.msra.mxu0 0.0
    %476 = vmatprep.subr.mxu0 0.0
    %477 = vmatpush1.msra.mxu0 0.0
    %478 = vmatprep.subr.mxu0 0.0
    %479 = vmatpush1.msra.mxu0 0.0
    %480 = vmatprep.subr.mxu0 0.0
    %481 = vmatpush1.msra.mxu0 0.0
    %482 = vmatprep.subr.mxu0 0.0
    %483 = vmatpush1.msra.mxu0 0.0
    %484 = vmatprep.subr.mxu0 0.0
    %485 = vmatpush1.msra.mxu0 0.0
    %486 = vmatprep.subr.mxu0 0.0
    %487 = vmatpush1.msra.mxu0 0.0
    %488 = vmatprep.subr.mxu0 0.0
    %489 = vmatpush1.msra.mxu0 0.0
    %490 = vmatprep.subr.mxu0 0.0
    %491 = vmatpush1.msra.mxu0 0.0
    %492 = vmatprep.mubr.f32.mxu0 0.0
    %493 = vmatmul.mubr.f32.gmra.mrb[0].mxu0 %v417
    %v494 = vpop.f32.mrb[0].mxu0
    %v495 = vadd.f32 %v398, %v494
    %v496 = vpop.f32.mrb[0].mxu0
    %497 = vmatprep.mubr.f32.mxu0 0.0
    %498 = vmatmul.mubr.f32.gmra.mrb[0].mxu0 %v420
    %v499 = vpop.f32.mrb[0].mxu0
    %v500 = vadd.f32 %v403, %v499
    %v501 = vpop.f32.mrb[0].mxu0
    %502 = vmatprep.mubr.f32.mxu0 0.0
    %503 = vmatmul.mubr.f32.gmra.mrb[0].mxu0 %v423
    %v504 = vpop.f32.mrb[0].mxu0
    %v505 = vadd.f32 %v408, %v504
    %v506 = vpop.f32.mrb[0].mxu0
    %507 = vmatprep.mubr.f32.mxu0 0.0
    %508 = vmatmul.mubr.f32.gmra.mrb[0].mxu0 %v426
    %v509 = vpop.f32.mrb[0].mxu0
    %v510 = vadd.f32 %v413, %v509
    %v511 = vpop.f32.mrb[0].mxu0
    %512 = vdwg.mxu0
    %v513 = vmul.f32 %v286, %v495
    %v514 = vmul.f32 %v291, %v500
    %v515 = vmul.f32 %v296, %v505
    %v516 = vmul.f32 %v301, %v510
    %v517 = vadd.f32 %v513, %v514
    %v518 = vadd.f32 %v517, %v515
    %v519 = vadd.f32 %v518, %v516
    %v520 = vrot.slane %v519, 4
    %v521 = vadd.f32 %v519, %v520
    %v522 = vrot.slane %v521, 2
    %v523 = vadd.f32 %v521, %v522
    %v524 = vrot.slane %v523, 1
    %v525 = vadd.f32 %v523, %v524
    %v526 = vxor.u32 %v525, 2147483648
    %v527 = vmul.f32 %v526, 1.442695
    %v528 = vpow.pop %v527
    %v529 = vadd.f32 %v528, 1.0
    %v530 = vrcp.pop %v529
    %v531 = vmul.f32 1.0, %v530
    %532 = vst [vmem:[#allocation2] sm:$0x1] %v531
    // Predicated region
    $region14: #{tpu_custom_call.1} parent=1 // pred_check
      _
    $region15: #{tpu_custom_call.1} parent=1 // pred_check_branch
      %534 = sbr.rel (0) target = $region17
    $region16: #{tpu_custom_call.1} parent=1 // pred_region
      %s536 = ssub.s32 16, 16
      %537 = vsyncadd [#allocation3], %s536
      %s539 = sshll.u32 [#allocation2], 4
      %s540 = int_to_ptr.vmem [resolvable:$true] %s539
      %542 = dma.vmem_to_hbm [thread:$0]  %s540, 16, %s3, [#allocation3]
    $region17: #{tpu_custom_call.1} parent=1 // pred_fallthru
      _
    // Predicated region
    $region18: #{tpu_custom_call.1} parent=1 // pred_check
      _
    $region19: #{tpu_custom_call.1} parent=1 // pred_check_branch
      %544 = sbr.rel (0) target = $region21
    $region20: #{tpu_custom_call.1} parent=1 // pred_region
      %545 = dma.done [#allocation3], 16
    $region21: #{tpu_custom_call.1} parent=1 // pred_fallthru
      _
    %546 = vsyncpa [#allocation3], 1

</llo_original>
